<compile_context>
chip_gen: v6e
topology: v6e:2x2x1
jax: 0.10.0
libtpu: 0.0.40
codegen_flags: <defaults>
</compile_context>

<pallas_src>
import functools
import math

import jax
import jax.numpy as jnp
from jax.experimental import pallas as pl
from jax.experimental.pallas import tpu as pltpu


def _round_up(x, m):
    return (x + m - 1) // m * m


def _device_kind():
    try:
        return jax.devices()[0].device_kind.lower()
    except Exception:
        return ""


def _default_exp_dtype(compute_dtype):
    """bf16 exponent only on chips with a bf16 EUP (v6e / v7x)."""
    if jnp.dtype(compute_dtype) != jnp.dtype(jnp.bfloat16):
        return jnp.float32
    kind = _device_kind()
    if any(tag in kind for tag in ("v2", "v3", "v4", "v5")):
        return jnp.float32          # no bf16 EUP on these generations
    return jnp.bfloat16


def _default_vmem_limit():
    kind = _device_kind()
    if "v7" in kind or "7x" in kind:
        return 48 * 1024 * 1024     # headroom under v7x's 64 MiB physical VMEM
    return 96 * 1024 * 1024         # v5e / v6e have 128 MiB physical VMEM


def _flash_attn_kernel(xq_ref, q_ref, v_ref, wkT_ref, woT_ref, o_ref,
                       m_sc, l_sc, acc_sc, k_sc, *,
                       block_k, s_valid, s_padded, kv_tiles,
                       compute_dtype, exp_dtype):
    ki = pl.program_id(2)

    @pl.when(ki == 0)
    def _init():
        m_sc[...] = jnp.full(m_sc.shape, -jnp.inf, m_sc.dtype)
        l_sc[...] = jnp.zeros(l_sc.shape, l_sc.dtype)
        acc_sc[...] = jnp.zeros(acc_sc.shape, acc_sc.dtype)
        # Hoisted K-role projection: depends only on (b, q-tile); computed once
        # and reused for every kv step of this q-tile.
        k_sc[...] = jnp.dot(xq_ref[...], wkT_ref[...],
                            preferred_element_type=jnp.float32).astype(k_sc.dtype)

    k_rows = k_sc[...]     # (bq, Ap)  rows producing output (K-projection role)
    q_rows = q_ref[...]    # (bk, Ap)  precomputed, pre-scaled Q projection
    v_rows = v_ref[...]    # (bk, Ap)  precomputed V projection

    # logits[i, j] = K_i . Q_j : contract the A dims directly (no on-chip
    # transposes); f32 accumulation on the MXU.
    s = jax.lax.dot_general(k_rows, q_rows, (((1,), (1,)), ((), ())),
                            preferred_element_type=jnp.float32)          # (bq, bk)

    if s_padded != s_valid:
        # Only the last kv tile straddles S (Sp = round_up(S, bs)); mask it
        # there only.  Every kv tile holds >= 1 valid column, so using -inf
        # can never produce an all--inf row (no exp(-inf - -inf) NaN).
        def _mask_padded(t):
            col = (kv_tiles - 1) * block_k + jax.lax.broadcasted_iota(
                jnp.int32, t.shape, 1)
            return jnp.where(col < s_valid, t, -jnp.inf)

        if kv_tiles == 1:
            s = _mask_padded(s)
        else:
            s = jax.lax.cond(ki == kv_tiles - 1, _mask_padded, lambda t: t, s)

    # Online softmax over the kv axis.  max / alpha / row-sum / accumulator are
    # f32; the (bq, bk) exponent runs in exp_dtype (bf16 on v6e/v7x EUP).
    m_prev = m_sc[...]
    m_new = jnp.maximum(m_prev, jnp.max(s, axis=-1, keepdims=True))
    alpha = jnp.exp(m_prev - m_new)
    p = jnp.exp((s - m_new).astype(exp_dtype))
    l_sc[...] = alpha * l_sc[...] + jnp.sum(p.astype(jnp.float32), axis=-1,
                                            keepdims=True)
    acc_sc[...] = alpha * acc_sc[...] + jnp.dot(
        p.astype(compute_dtype), v_rows, preferred_element_type=jnp.float32)
    m_sc[...] = m_new

    @pl.when(ki == kv_tiles - 1)
    def _finalize():
        # Deferred normalization; approx reciprocal runs on the EUP slot.
        inv_l = pl.reciprocal(l_sc[...], approx=True)
        attn = (acc_sc[...] * inv_l).astype(compute_dtype)                # (bq, Ap)
        out = jnp.dot(attn, woT_ref[...], preferred_element_type=jnp.float32)
        o_ref[...] = out.astype(o_ref.dtype)


def self_attention(x, wk, wq, wv, wo, *,
                   block_s=256,
                   compute_dtype=jnp.bfloat16,
                   exp_dtype=None,
                   vmem_limit_bytes=None):
    """Fused flash-style self-attention forward.

    x:  (B, S, D) activations.
    wk, wq, wv: (A, D) PyTorch-layout Linear weights; wo: (O, A).

    Tile guidance: v7x -> block_s 256-384 (vmem cap ~48-56 MiB, default here);
    v5e/v6e -> block_s 512-1024 with vmem_limit ~96-110 MiB; drop block_s to
    128 on v5e if a bundle dump shows ld/st slot saturation from the (bs, bs)
    score/probability intermediates.  Asymmetric q/kv tiles (small q, big kv)
    are a further option on v6e/v7x but are not implemented here.  On v7x,
    keep B * (Sp // bs) >= 2 so both TensorCores get work (shrink block_s if
    B == 1 and the sequence is short).  Do not pad A/O beyond 128 without
    measuring: the logits matmul's N dim is already bs.
    """
    B, S, D = x.shape
    A = wk.shape[0]
    O = wo.shape[0]

    if exp_dtype is None:
        exp_dtype = _default_exp_dtype(compute_dtype)
    if vmem_limit_bytes is None:
        vmem_limit_bytes = _default_vmem_limit()

    # Fold the 1/sqrt(A) softmax scale into W_Q (applied once, off-chip).
    scale = 1.0 / math.sqrt(A)

    # Lane-dense zero padding of feature dims (exact: padded A columns
    # contribute 0 to logits/attention; padded O columns are sliced off).
    Dp = _round_up(D, 128)
    Ap = _round_up(A, 128)
    Op = _round_up(O, 128)

    # bf16 blocks need (16, 128) granularity -> seq tile is a multiple of 16.
    bs = min(_round_up(block_s, 16), _round_up(S, 16))
    Sp = _round_up(S, bs)
    kv_tiles = Sp // bs

    def pad2(a, r, c):
        return jnp.pad(a, ((0, r - a.shape[0]), (0, c - a.shape[1])))

    # Pre-transpose weights to (in, out) so the kernel never transposes on-chip.
    wkT = pad2(wk.T, Dp, Ap).astype(compute_dtype)
    wqT = pad2((wq * scale).T, Dp, Ap).astype(compute_dtype)
    wvT = pad2(wv.T, Dp, Ap).astype(compute_dtype)
    woT = pad2(wo.T, Ap, Op).astype(compute_dtype)

    xp = jnp.pad(x, ((0, 0), (0, Sp - S), (0, Dp - D))).astype(compute_dtype)

    # Q / V (kv-role) projections depend only on (b, kv-tile): compute them once
    # for the whole padded sequence with plain XLA matmuls instead of
    # re-projecting inside every q-tile of the flash loop.  Padded rows of xp
    # are zero, so padded rows of q_rows / v_rows are exactly zero.
    q_rows = jnp.einsum("bsd,da->bsa", xp, wqT,
                        preferred_element_type=jnp.float32).astype(compute_dtype)
    v_rows = jnp.einsum("bsd,da->bsa", xp, wvT,
                        preferred_element_type=jnp.float32).astype(compute_dtype)

    grid = (B, Sp // bs, kv_tiles)   # (batch, q tiles, kv tiles)

    kernel = functools.partial(
        _flash_attn_kernel,
        block_k=bs, s_valid=S, s_padded=Sp, kv_tiles=kv_tiles,
        compute_dtype=compute_dtype, exp_dtype=exp_dtype)

    out = pl.pallas_call(
        kernel,
        out_shape=jax.ShapeDtypeStruct((B, Sp, Op), x.dtype),
        grid_spec=pltpu.PrefetchScalarGridSpec(
            num_scalar_prefetch=0,
            grid=grid,
            in_specs=[
                # x tile providing output rows (K-projection role)
                pl.BlockSpec((pl.Squeezed(), bs, Dp), lambda b, qi, ki: (b, qi, 0)),
                # precomputed (pre-scaled) Q rows for the kv tile
                pl.BlockSpec((pl.Squeezed(), bs, Ap), lambda b, qi, ki: (b, ki, 0)),
                # precomputed V rows for the kv tile
                pl.BlockSpec((pl.Squeezed(), bs, Ap), lambda b, qi, ki: (b, ki, 0)),
                # Weights: constant index_map -> single-buffered to save VMEM.
                pl.BlockSpec((Dp, Ap), lambda b, qi, ki: (0, 0),
                             pipeline_mode=pl.Buffered(1)),   # W_K^T
                pl.BlockSpec((Ap, Op), lambda b, qi, ki: (0, 0),
                             pipeline_mode=pl.Buffered(1)),   # W_out^T
            ],
            out_specs=pl.BlockSpec((pl.Squeezed(), bs, Op),
                                   lambda b, qi, ki: (b, qi, 0)),
            scratch_shapes=[
                pltpu.VMEM((bs, 1), jnp.float32),      # running max
                pltpu.VMEM((bs, 1), jnp.float32),      # running denominator
                pltpu.VMEM((bs, Ap), jnp.float32),     # un-normalized accumulator
                pltpu.VMEM((bs, Ap), compute_dtype),   # hoisted K-role projection
            ],
        ),
        compiler_params=pltpu.CompilerParams(
            dimension_semantics=("parallel", "parallel", "arbitrary"),
            vmem_limit_bytes=vmem_limit_bytes),
    )(xp, q_rows, v_rows, wkT, woT)

    return out[:, :S, :O]


def self_attention_ref(x, wk, wq, wv, wo):
    """Pure-JAX reference mirroring the PyTorch forward literally (f32)."""
    K = x @ wk.T                                   # (B, S, A)
    Q = jnp.swapaxes(x @ wq.T, -1, -2)             # (B, A, S)
    V = jnp.swapaxes(x @ wv.T, -1, -2)             # (B, A, S)
    logits = (K @ Q) / jnp.sqrt(jnp.float32(wk.shape[0]))
    weight = jax.nn.softmax(logits, axis=-1)
    weight = jnp.swapaxes(weight, -1, -2)
    mid = V @ weight
    attention = jnp.swapaxes(mid, -1, -2)          # (B, S, A)
    return attention @ wo.T                        # (B, S, O)


if __name__ == "__main__":
    key = jax.random.PRNGKey(0)
    kx1, kx2, kk, kq, kv, ko = jax.random.split(key, 6)

    input_size, attention_size, output_size = 16, 32, 16

    # PyTorch nn.Linear default init: U(-1/sqrt(fan_in), 1/sqrt(fan_in))
    def linear_w(k, out_f, in_f):
        bound = 1.0 / math.sqrt(in_f)
        return jax.random.uniform(k, (out_f, in_f), jnp.float32, -bound, bound)

    wk = linear_w(kk, attention_size, input_size)
    wq = linear_w(kq, attention_size, input_size)
    wv = linear_w(kv, attention_size, input_size)
    wo = linear_w(ko, output_size, attention_size)

    # --- Test 1: original small shape (single kv tile, heavy padding) -------
    B1, S1 = 2, 8
    x1 = jax.random.normal(kx1, (B1, S1, input_size), dtype=jnp.float32)
    ref1 = jax.block_until_ready(self_attention_ref(x1, wk, wq, wv, wo))

    out1_f32 = jax.block_until_ready(
        self_attention(x1, wk, wq, wv, wo, compute_dtype=jnp.float32))
    assert out1_f32.shape == (B1, S1, output_size)
    assert jnp.allclose(out1_f32, ref1, atol=1e-2, rtol=1e-2), "t1 f32 mismatch"

    out1_bf16 = jax.block_until_ready(self_attention(x1, wk, wq, wv, wo))
    assert out1_bf16.shape == (B1, S1, output_size)
    assert jnp.allclose(out1_bf16, ref1, atol=3e-2, rtol=3e-2), "t1 bf16 mismatch"

    # --- Test 2: multi kv-tile path (odd S, masked last tile, hoisted K) ----
    B2, S2 = 2, 150
    x2 = jax.random.normal(kx2, (B2, S2, input_size), dtype=jnp.float32)
    ref2 = jax.block_until_ready(self_attention_ref(x2, wk, wq, wv, wo))

    out2_f32 = jax.block_until_ready(
        self_attention(x2, wk, wq, wv, wo, block_s=64, compute_dtype=jnp.float32))
    assert out2_f32.shape == (B2, S2, output_size)
    assert jnp.allclose(out2_f32, ref2, atol=1e-2, rtol=1e-2), "t2 f32 mismatch"

    out2_bf16 = jax.block_until_ready(
        self_attention(x2, wk, wq, wv, wo, block_s=64))
    assert out2_bf16.shape == (B2, S2, output_size)
    assert jnp.allclose(out2_bf16, ref2, atol=3e-2, rtol=3e-2), "t2 bf16 mismatch"

    print("KERNEL_OK")
</pallas_src>

<mosaic_0001>
module attributes {stable_mosaic.version = 11 : i64} {
  func.func @_flash_attn_kernel(%arg0: i32, %arg1: i32, %arg2: i32, %arg3: memref<1x16x128xf32, #tpu.memory_space<vmem>>, %arg4: memref<1x16x128xf32, #tpu.memory_space<vmem>>, %arg5: memref<1x16x128xf32, #tpu.memory_space<vmem>>, %arg6: memref<128x128xf32, #tpu.memory_space<vmem>>, %arg7: memref<128x128xf32, #tpu.memory_space<vmem>>, %arg8: memref<1x16x128xf32, #tpu.memory_space<vmem>>, %arg9: memref<16x1xf32, #tpu.memory_space<vmem>>, %arg10: memref<16x1xf32, #tpu.memory_space<vmem>>, %arg11: memref<16x128xf32, #tpu.memory_space<vmem>>, %arg12: memref<16x128xf32, #tpu.memory_space<vmem>>) attributes {dimension_semantics = [#tpu.dimension_semantics<parallel>, #tpu.dimension_semantics<parallel>, #tpu.dimension_semantics<arbitrary>], iteration_bounds = array<i64: 2, 1, 1>, scalar_prefetch = 0 : i64, scratch_operands = 4 : i64, tpu.core_type = #tpu.core_type<tc>, window_params = [{transform_indices = @transform_0, window_bounds = array<i64: 1, 16, 128>}, {transform_indices = @transform_1, window_bounds = array<i64: 1, 16, 128>}, {transform_indices = @transform_2, window_bounds = array<i64: 1, 16, 128>}, {pipeline_mode = #tpu.pipeline_mode<synchronous>, transform_indices = @transform_3, window_bounds = array<i64: 128, 128>}, {pipeline_mode = #tpu.pipeline_mode<synchronous>, transform_indices = @transform_4, window_bounds = array<i64: 128, 128>}, {transform_indices = @transform_5, window_bounds = array<i64: 1, 16, 128>}]} {
    %c0_i32 = arith.constant 0 : i32
    %0 = arith.cmpi eq, %arg2, %c0_i32 : i32
    %1 = arith.extui %0 : i1 to i32
    %c0_i32_0 = arith.constant 0 : i32
    %2 = arith.cmpi ne, %1, %c0_i32_0 : i32
    scf.if %2 {
      %cst_27 = arith.constant 0xFF800000 : f32
      %41 = vector.broadcast %cst_27 : f32 to vector<16x1xf32>
      %c0_28 = arith.constant 0 : index
      %c0_29 = arith.constant 0 : index
      %42 = vector.load %arg9[%c0_28, %c0_29] : memref<16x1xf32, #tpu.memory_space<vmem>>, vector<16x1xf32>
      tpu.vector_store %arg9[%c0_28, %c0_29], %41 {strides = array<i32>} : memref<16x1xf32, #tpu.memory_space<vmem>>, vector<16x1xf32>,
      %cst_30 = arith.constant 0.000000e+00 : f32
      %43 = vector.broadcast %cst_30 : f32 to vector<16x1xf32>
      %c0_31 = arith.constant 0 : index
      %c0_32 = arith.constant 0 : index
      %44 = vector.load %arg10[%c0_31, %c0_32] : memref<16x1xf32, #tpu.memory_space<vmem>>, vector<16x1xf32>
      tpu.vector_store %arg10[%c0_31, %c0_32], %43 {strides = array<i32>} : memref<16x1xf32, #tpu.memory_space<vmem>>, vector<16x1xf32>,
      %cst_33 = arith.constant 0.000000e+00 : f32
      %45 = vector.broadcast %cst_33 : f32 to vector<16x128xf32>
      %c0_34 = arith.constant 0 : index
      %c0_35 = arith.constant 0 : index
      %46 = vector.load %arg11[%c0_34, %c0_35] : memref<16x128xf32, #tpu.memory_space<vmem>>, vector<16x128xf32>
      tpu.vector_store %arg11[%c0_34, %c0_35], %45 {strides = array<i32>} : memref<16x128xf32, #tpu.memory_space<vmem>>, vector<16x128xf32>,
      %c0_36 = arith.constant 0 : index
      %c0_37 = arith.constant 0 : index
      %c0_38 = arith.constant 0 : index
      %47 = vector.load %arg3[%c0_36, %c0_37, %c0_38] : memref<1x16x128xf32, #tpu.memory_space<vmem>>, vector<1x16x128xf32>
      %48 = vector.shape_cast %47 : vector<1x16x128xf32> to vector<16x128xf32>
      %c0_39 = arith.constant 0 : index
      %c0_40 = arith.constant 0 : index
      %49 = vector.load %arg6[%c0_39, %c0_40] : memref<128x128xf32, #tpu.memory_space<vmem>>, vector<128x128xf32>
      %cst_41 = arith.constant dense<0.000000e+00> : vector<16x128xf32>
      %50 = tpu.matmul %48, %49, %cst_41 {dimension_numbers = #tpu.dot_dimension_numbers<[1], [0], [0], [1], [0, 0, 1, 1], [], []>} : vector<16x128xf32>, vector<128x128xf32>, vector<16x128xf32> -> vector<16x128xf32>
      %c0_42 = arith.constant 0 : index
      %c0_43 = arith.constant 0 : index
      %51 = vector.load %arg12[%c0_42, %c0_43] : memref<16x128xf32, #tpu.memory_space<vmem>>, vector<16x128xf32>
      tpu.vector_store %arg12[%c0_42, %c0_43], %50 {strides = array<i32>} : memref<16x128xf32, #tpu.memory_space<vmem>>, vector<16x128xf32>,
    } else {
    }
    %c0 = arith.constant 0 : index
    %c0_1 = arith.constant 0 : index
    %3 = vector.load %arg12[%c0, %c0_1] : memref<16x128xf32, #tpu.memory_space<vmem>>, vector<16x128xf32>
    %c0_2 = arith.constant 0 : index
    %c0_3 = arith.constant 0 : index
    %c0_4 = arith.constant 0 : index
    %4 = vector.load %arg4[%c0_2, %c0_3, %c0_4] : memref<1x16x128xf32, #tpu.memory_space<vmem>>, vector<1x16x128xf32>
    %5 = vector.shape_cast %4 : vector<1x16x128xf32> to vector<16x128xf32>
    %c0_5 = arith.constant 0 : index
    %c0_6 = arith.constant 0 : index
    %c0_7 = arith.constant 0 : index
    %6 = vector.load %arg5[%c0_5, %c0_6, %c0_7] : memref<1x16x128xf32, #tpu.memory_space<vmem>>, vector<1x16x128xf32>
    %7 = vector.shape_cast %6 : vector<1x16x128xf32> to vector<16x128xf32>
    %cst = arith.constant dense<0.000000e+00> : vector<16x16xf32>
    %8 = tpu.matmul %3, %5, %cst {dimension_numbers = #tpu.dot_dimension_numbers<[1], [1], [0], [0], [0, 0, 1, 0], [], []>} : vector<16x128xf32>, vector<16x128xf32>, vector<16x16xf32> -> vector<16x16xf32>
    %9 = tpu.iota {dimensions = array<i32: 1>} : vector<16x16xi32>
    %c0_i32_8 = arith.constant 0 : i32
    %10 = vector.broadcast %c0_i32_8 : i32 to vector<16x16xi32>
    %11 = arith.addi %10, %9 : vector<16x16xi32>
    %c8_i32 = arith.constant 8 : i32
    %12 = vector.broadcast %c8_i32 : i32 to vector<16x16xi32>
    %13 = arith.cmpi slt, %11, %12 : vector<16x16xi32>
    %cst_9 = arith.constant 0xFF800000 : f32
    %14 = vector.broadcast %cst_9 : f32 to vector<16x16xf32>
    %15 = arith.select %13, %8, %14 : vector<16x16xi1>, vector<16x16xf32>
    %c0_10 = arith.constant 0 : index
    %c0_11 = arith.constant 0 : index
    %16 = vector.load %arg9[%c0_10, %c0_11] : memref<16x1xf32, #tpu.memory_space<vmem>>, vector<16x1xf32>
    %cst_12 = arith.constant dense<0xFF800000> : vector<16xf32>
    %17 = vector.multi_reduction <maximumf>, %15, %cst_12 [1] : vector<16x16xf32> to vector<16xf32>
    %18 = vector.shape_cast %17 : vector<16xf32> to vector<16x1xf32>
    %19 = arith.maximumf %16, %18 : vector<16x1xf32>
    %20 = arith.subf %16, %19 : vector<16x1xf32>
    %21 = math.exp %20 : vector<16x1xf32>
    %22 = vector.broadcast %19 : vector<16x1xf32> to vector<16x16xf32>
    %23 = arith.subf %15, %22 : vector<16x16xf32>
    %24 = math.exp %23 : vector<16x16xf32>
    %c0_13 = arith.constant 0 : index
    %c0_14 = arith.constant 0 : index
    %25 = vector.load %arg10[%c0_13, %c0_14] : memref<16x1xf32, #tpu.memory_space<vmem>>, vector<16x1xf32>
    %26 = arith.mulf %21, %25 : vector<16x1xf32>
    %cst_15 = arith.constant dense<0.000000e+00> : vector<16xf32>
    %27 = vector.multi_reduction <add>, %24, %cst_15 [1] : vector<16x16xf32> to vector<16xf32>
    %28 = vector.shape_cast %27 : vector<16xf32> to vector<16x1xf32>
    %29 = arith.addf %26, %28 : vector<16x1xf32>
    %c0_16 = arith.constant 0 : index
    %c0_17 = arith.constant 0 : index
    %30 = vector.load %arg10[%c0_16, %c0_17] : memref<16x1xf32, #tpu.memory_space<vmem>>, vector<16x1xf32>
    tpu.vector_store %arg10[%c0_16, %c0_17], %29 {strides = array<i32>} : memref<16x1xf32, #tpu.memory_space<vmem>>, vector<16x1xf32>,
    %c0_18 = arith.constant 0 : index
    %c0_19 = arith.constant 0 : index
    %31 = vector.load %arg11[%c0_18, %c0_19] : memref<16x128xf32, #tpu.memory_space<vmem>>, vector<16x128xf32>
    %32 = vector.broadcast %21 : vector<16x1xf32> to vector<16x128xf32>
    %33 = arith.mulf %32, %31 : vector<16x128xf32>
    %cst_20 = arith.constant dense<0.000000e+00> : vector<16x128xf32>
    %34 = tpu.matmul %24, %7, %cst_20 {dimension_numbers = #tpu.dot_dimension_numbers<[1], [0], [0], [1], [0, 0, 1, 1], [], []>} : vector<16x16xf32>, vector<16x128xf32>, vector<16x128xf32> -> vector<16x128xf32>
    %35 = arith.addf %33, %34 : vector<16x128xf32>
    %c0_21 = arith.constant 0 : index
    %c0_22 = arith.constant 0 : index
    %36 = vector.load %arg11[%c0_21, %c0_22] : memref<16x128xf32, #tpu.memory_space<vmem>>, vector<16x128xf32>
    tpu.vector_store %arg11[%c0_21, %c0_22], %35 {strides = array<i32>} : memref<16x128xf32, #tpu.memory_space<vmem>>, vector<16x128xf32>,
    %c0_23 = arith.constant 0 : index
    %c0_24 = arith.constant 0 : index
    %37 = vector.load %arg9[%c0_23, %c0_24] : memref<16x1xf32, #tpu.memory_space<vmem>>, vector<16x1xf32>
    tpu.vector_store %arg9[%c0_23, %c0_24], %19 {strides = array<i32>} : memref<16x1xf32, #tpu.memory_space<vmem>>, vector<16x1xf32>,
    %c0_i32_25 = arith.constant 0 : i32
    %38 = arith.cmpi eq, %arg2, %c0_i32_25 : i32
    %39 = arith.extui %38 : i1 to i32
    %c0_i32_26 = arith.constant 0 : i32
    %40 = arith.cmpi ne, %39, %c0_i32_26 : i32
    scf.if %40 {
      %c0_27 = arith.constant 0 : index
      %c0_28 = arith.constant 0 : index
      %41 = vector.load %arg10[%c0_27, %c0_28] : memref<16x1xf32, #tpu.memory_space<vmem>>, vector<16x1xf32>
      %42 = tpu.reciprocal %41 {approx = true} : vector<16x1xf32> -> vector<16x1xf32>
      %c0_29 = arith.constant 0 : index
      %c0_30 = arith.constant 0 : index
      %43 = vector.load %arg11[%c0_29, %c0_30] : memref<16x128xf32, #tpu.memory_space<vmem>>, vector<16x128xf32>
      %44 = vector.broadcast %42 : vector<16x1xf32> to vector<16x128xf32>
      %45 = arith.mulf %43, %44 : vector<16x128xf32>
      %c0_31 = arith.constant 0 : index
      %c0_32 = arith.constant 0 : index
      %46 = vector.load %arg7[%c0_31, %c0_32] : memref<128x128xf32, #tpu.memory_space<vmem>>, vector<128x128xf32>
      %cst_33 = arith.constant dense<0.000000e+00> : vector<16x128xf32>
      %47 = tpu.matmul %45, %46, %cst_33 {dimension_numbers = #tpu.dot_dimension_numbers<[1], [0], [0], [1], [0, 0, 1, 1], [], []>} : vector<16x128xf32>, vector<128x128xf32>, vector<16x128xf32> -> vector<16x128xf32>
      %c0_34 = arith.constant 0 : index
      %c0_35 = arith.constant 0 : index
      %c0_36 = arith.constant 0 : index
      %48 = vector.load %arg8[%c0_34, %c0_35, %c0_36] : memref<1x16x128xf32, #tpu.memory_space<vmem>>, vector<1x16x128xf32>
      %49 = vector.shape_cast %48 : vector<1x16x128xf32> to vector<16x128xf32>
      %50 = vector.shape_cast %47 : vector<16x128xf32> to vector<1x16x128xf32>
      tpu.vector_store %arg8[%c0_34, %c0_35, %c0_36], %50 {strides = array<i32>} : memref<1x16x128xf32, #tpu.memory_space<vmem>>, vector<1x16x128xf32>,
    } else {
    }
    return
  }
  func.func @transform_0(%arg0: i32, %arg1: i32, %arg2: i32) -> (i32, i32, i32) {
    %c0_i32 = arith.constant 0 : i32
    %c0_i32_0 = arith.constant 0 : i32
    return %arg0, %arg1, %c0_i32 : i32, i32, i32
  }
  func.func @transform_1(%arg0: i32, %arg1: i32, %arg2: i32) -> (i32, i32, i32) {
    %c0_i32 = arith.constant 0 : i32
    %c0_i32_0 = arith.constant 0 : i32
    return %arg0, %arg2, %c0_i32 : i32, i32, i32
  }
  func.func @transform_2(%arg0: i32, %arg1: i32, %arg2: i32) -> (i32, i32, i32) {
    %c0_i32 = arith.constant 0 : i32
    %c0_i32_0 = arith.constant 0 : i32
    return %arg0, %arg2, %c0_i32 : i32, i32, i32
  }
  func.func @transform_3(%arg0: i32, %arg1: i32, %arg2: i32) -> (i32, i32) {
    %c0_i32 = arith.constant 0 : i32
    %c0_i32_0 = arith.constant 0 : i32
    %c0_i32_1 = arith.constant 0 : i32
    return %c0_i32, %c0_i32_0 : i32, i32
  }
  func.func @transform_4(%arg0: i32, %arg1: i32, %arg2: i32) -> (i32, i32) {
    %c0_i32 = arith.constant 0 : i32
    %c0_i32_0 = arith.constant 0 : i32
    %c0_i32_1 = arith.constant 0 : i32
    return %c0_i32, %c0_i32_0 : i32, i32
  }
  func.func @transform_5(%arg0: i32, %arg1: i32, %arg2: i32) -> (i32, i32, i32) {
    %c0_i32 = arith.constant 0 : i32
    %c0_i32_0 = arith.constant 0 : i32
    return %arg0, %arg1, %c0_i32 : i32, i32, i32
  }
}

</mosaic_0001>

<llo_original>
// kernel: tpu_custom_call.1
$region0: #{tpu_custom_call.1}
  #allocation0 [shape = 'u32[]', space=smem, size = 0x4, offset = 0x4, fixed_abs, tag = 'smem constant byte address 0x4 - core index']
  #allocation1 [shape = 'u32[144,128]{1,0:T(1,128)}', space=vmem, size = 0x12000, scoped, tag = 'internal scratch']
  #allocation2 [shape = 'f32[16,1]{1,0:T(8,128)}', space=vmem, size = 0x2000, scoped, tag = 'scratch operand']
  #allocation3 [shape = 'f32[16,1]{1,0:T(8,128)}', space=vmem, size = 0x2000, scoped, tag = 'scratch operand']
  #allocation4 [shape = 'f32[16,128]{1,0:T(8,128)}', space=vmem, size = 0x2000, scoped, tag = 'scratch operand']
  #allocation5 [shape = 'f32[16,128]{1,0:T(8,128)}', space=vmem, size = 0x2000, scoped, tag = 'scratch operand']
  %s0 = inlined_call_operand.hbm [shape: f32[2,16,128], index: 0, kind: input, shape index: {}]
  %s1 = inlined_call_operand.hbm [shape: f32[2,16,128], index: 1, kind: input, shape index: {}]
  %s2 = inlined_call_operand.hbm [shape: f32[2,16,128], index: 2, kind: input, shape index: {}]
  %s3 = inlined_call_operand.hbm [shape: f32[128,128], index: 3, kind: input, shape index: {}]
  %s4 = inlined_call_operand.hbm [shape: f32[128,128], index: 4, kind: input, shape index: {}]
  %s5 = inlined_call_operand.hbm [shape: f32[2,16,128], index: 5, kind: output, shape index: {}]
  %s6 = sld [smem:[#allocation0]]
  $region81: #{tpu_custom_call.1} parent=0
    _
  %s8 = ssub.s32 1, %s6
  %s9 = scalar_select 0, %s8, %s6
  $region1: #{tpu_custom_call.1} parent=0
    #allocation6 [shape = 'u8[16384]{0}', space=vmem, size = 0x4000, scoped, tag = 'input window, operand 0']
    #allocation7 [shape = 's32[2]{0}', space=sflag, size = 0x8, scoped, tag = 'scoped memory for tpu_custom_call.1']
    #allocation8 [shape = 's32[2]{0}', space=sflag, size = 0x8, scoped, tag = 'scoped memory for tpu_custom_call.1']
    #allocation9 [shape = 'u8[16384]{0}', space=vmem, size = 0x4000, scoped, tag = 'input window, operand 1']
    #allocation10 [shape = 's32[2]{0}', space=sflag, size = 0x8, scoped, tag = 'scoped memory for tpu_custom_call.1']
    #allocation11 [shape = 'u8[16384]{0}', space=vmem, size = 0x4000, scoped, tag = 'input window, operand 2']
    #allocation12 [shape = 'u8[65536]{0}', space=vmem, size = 0x10000, scoped, tag = 'input window, operand 3, single buffered']
    #allocation13 [shape = 's32[1]{0}', space=sflag, size = 0x4, scoped, tag = 'scoped memory for tpu_custom_call.1']
    #allocation14 [shape = 'u8[65536]{0}', space=vmem, size = 0x10000, scoped, tag = 'input window, operand 4, single buffered']
    #allocation15 [shape = 'u8[16384]{0}', space=vmem, size = 0x4000, scoped, tag = 'output window, operand 0']
    %10 = vsyncpa [#allocation7], 0
    %s11 = scalar_lea.sflag [#allocation7], 1
    %12 = vsyncpa %s11, 0
    %13 = vsyncpa [#allocation10], 0
    %s14 = scalar_lea.sflag [#allocation10], 1
    %15 = vsyncpa %s14, 0
    %16 = vsyncpa [#allocation13], 0
    %17 = vsyncpa [#allocation8], 0
    %s18 = scalar_lea.sflag [#allocation8], 1
    %19 = vsyncpa %s18, 0
    loop: start=0, step=1, limit=4
    $region2: #{tpu_custom_call.1} parent=1 // loop_pre_header
      _
    $region3: #{tpu_custom_call.1} parent=1 // loop_header
      %s21 = sphi 0, %s25
      %p22 = scmp.ge.s32.totalorder %s21, 4
      %s28 = sphi 0, %s47
      %s29 = sphi 0, %s43
      %s30 = sphi 0, %s39
      %s31 = sphi 0, %s28
      %s32 = sphi 0, %s29
      %s33 = sphi 0, %s30
      %s34 = sphi 0, %s31
      %s35 = sphi 0, %s32
      %s36 = sphi 0, %s33
      %s52 = sphi 0, %s54
      %s55 = sphi 0, %s52
      %s56 = sphi 0, %s55
      %s72 = sphi 0, %s56
      %s80 = sphi 0, %s82
      %s83 = sphi 0, %s80
      %s84 = sphi 0, %s83
      %s100 = sphi 0, %s84
      %s108 = sphi 0, %s110
      %s111 = sphi 0, %s108
      %s112 = sphi 0, %s111
      %s128 = sphi 0, %s112
      %s132 = sphi 0, %s132
      %s134 = sphi 0, %s132
      %s135 = sphi 0, %s134
      %s149 = sphi 0, %s135
      %s153 = sphi 0, %s153
      %s155 = sphi 0, %s153
      %s156 = sphi 0, %s155
      %s170 = sphi 0, %s156
      %s178 = sphi 0, %s180
      %s181 = sphi 0, %s178
      %s182 = sphi 0, %s181
      %s198 = sphi 0, %s182
    $region4: #{tpu_custom_call.1} parent=1 // loop_header_branch
      %24 = sbr.rel (%p22) target = $region8
    $region5: #{tpu_custom_call.1} parent=1 // loop_body
      %s26 = ssub.s32 %s21, 1
      %s27 = ssub.s32 %s21, 2
      %s37 = sadd.s32 1, %s30
      %p38 = scmp.ge.s32.totalorder %s37, 1
      %s39 = scalar_select %p38, 0, %s37
      %s40 = sadd.s32 1, %s29
      %s41 = scalar_select %p38, %s40, %s29
      %p42 = scmp.ge.s32.totalorder %s41, 1
      %s43 = scalar_select %p42, 0, %s41
      %s44 = sadd.s32 1, %s28
      %s45 = scalar_select %p42, %s44, %s28
      %p46 = scmp.ge.s32.totalorder %s45, 2
      %s47 = scalar_select %p46, 0, %s45
      %s48 = ssub.s32 %s28, %s47
      %s49 = ssub.s32 %s29, %s43
      %s50 = sor.u32 %s48, %s49
      %p51 = scmp.eq.s32.totalorder %s50, 0
      %s53 = sadd.s32 %s52, 1
      %s54 = scalar_select %p51, %s52, %s53
      %p57 = pneg %p51
      %p58 = scmp.eq.s32.totalorder %s21, 1
      %p59 = por %p57, %p58
      %p60 = scmp.ne.s32.totalorder %s52, %s55
      %p61 = scmp.eq.s32.totalorder %s21, 0
      %p62 = por %p60, %p61
      %p63 = scmp.ne.s32.totalorder %s52, %s55
      %p64 = scmp.eq.s32.totalorder %s26, 1
      %p65 = por %p63, %p64
      %p66 = scmp.ne.s32.totalorder %s55, %s56
      %p67 = scmp.eq.s32.totalorder %s26, 0
      %p68 = por %p66, %p67
      %p69 = scmp.ne.s32.totalorder %s55, %s56
      %p70 = scmp.eq.s32.totalorder %s27, 1
      %p71 = por %p69, %p70
      %p73 = scmp.ne.s32.totalorder %s56, %s72
      %p74 = scmp.eq.s32.totalorder %s27, 0
      %p75 = por %p73, %p74
      %s76 = ssub.s32 %s28, %s47
      %s77 = ssub.s32 %s30, %s39
      %s78 = sor.u32 %s76, %s77
      %p79 = scmp.eq.s32.totalorder %s78, 0
      %s81 = sadd.s32 %s80, 1
      %s82 = scalar_select %p79, %s80, %s81
      %p85 = pneg %p79
      %p86 = scmp.eq.s32.totalorder %s21, 1
      %p87 = por %p85, %p86
      %p88 = scmp.ne.s32.totalorder %s80, %s83
      %p89 = scmp.eq.s32.totalorder %s21, 0
      %p90 = por %p88, %p89
      %p91 = scmp.ne.s32.totalorder %s80, %s83
      %p92 = scmp.eq.s32.totalorder %s26, 1
      %p93 = por %p91, %p92
      %p94 = scmp.ne.s32.totalorder %s83, %s84
      %p95 = scmp.eq.s32.totalorder %s26, 0
      %p96 = por %p94, %p95
      %p97 = scmp.ne.s32.totalorder %s83, %s84
      %p98 = scmp.eq.s32.totalorder %s27, 1
      %p99 = por %p97, %p98
      %p101 = scmp.ne.s32.totalorder %s84, %s100
      %p102 = scmp.eq.s32.totalorder %s27, 0
      %p103 = por %p101, %p102
      %s104 = ssub.s32 %s28, %s47
      %s105 = ssub.s32 %s30, %s39
      %s106 = sor.u32 %s104, %s105
      %p107 = scmp.eq.s32.totalorder %s106, 0
      %s109 = sadd.s32 %s108, 1
      %s110 = scalar_select %p107, %s108, %s109
      %p113 = pneg %p107
      %p114 = scmp.eq.s32.totalorder %s21, 1
      %p115 = por %p113, %p114
      %p116 = scmp.ne.s32.totalorder %s108, %s111
      %p117 = scmp.eq.s32.totalorder %s21, 0
      %p118 = por %p116, %p117
      %p119 = scmp.ne.s32.totalorder %s108, %s111
      %p120 = scmp.eq.s32.totalorder %s26, 1
      %p121 = por %p119, %p120
      %p122 = scmp.ne.s32.totalorder %s111, %s112
      %p123 = scmp.eq.s32.totalorder %s26, 0
      %p124 = por %p122, %p123
      %p125 = scmp.ne.s32.totalorder %s111, %s112
      %p126 = scmp.eq.s32.totalorder %s27, 1
      %p127 = por %p125, %p126
      %p129 = scmp.ne.s32.totalorder %s112, %s128
      %p130 = scmp.eq.s32.totalorder %s27, 0
      %p131 = por %p129, %p130
      %s133 = sadd.s32 %s132, 1
      %p136 = scmp.eq.s32.totalorder %s21, 1
      %p137 = scmp.ne.s32.totalorder %s132, %s134
      %p138 = scmp.eq.s32.totalorder %s21, 0
      %p139 = por %p137, %p138
      %p140 = scmp.ne.s32.totalorder %s132, %s134
      %p141 = scmp.eq.s32.totalorder %s26, 1
      %p142 = por %p140, %p141
      %p143 = scmp.ne.s32.totalorder %s134, %s135
      %p144 = scmp.eq.s32.totalorder %s26, 0
      %p145 = por %p143, %p144
      %p146 = scmp.ne.s32.totalorder %s134, %s135
      %p147 = scmp.eq.s32.totalorder %s27, 1
      %p148 = por %p146, %p147
      %p150 = scmp.ne.s32.totalorder %s135, %s149
      %p151 = scmp.eq.s32.totalorder %s27, 0
      %p152 = por %p150, %p151
      %s154 = sadd.s32 %s153, 1
      %p157 = scmp.eq.s32.totalorder %s21, 1
      %p158 = scmp.ne.s32.totalorder %s153, %s155
      %p159 = scmp.eq.s32.totalorder %s21, 0
      %p160 = por %p158, %p159
      %p161 = scmp.ne.s32.totalorder %s153, %s155
      %p162 = scmp.eq.s32.totalorder %s26, 1
      %p163 = por %p161, %p162
      %p164 = scmp.ne.s32.totalorder %s155, %s156
      %p165 = scmp.eq.s32.totalorder %s26, 0
      %p166 = por %p164, %p165
      %p167 = scmp.ne.s32.totalorder %s155, %s156
      %p168 = scmp.eq.s32.totalorder %s27, 1
      %p169 = por %p167, %p168
      %p171 = scmp.ne.s32.totalorder %s156, %s170
      %p172 = scmp.eq.s32.totalorder %s27, 0
      %p173 = por %p171, %p172
      %s174 = ssub.s32 %s28, %s47
      %s175 = ssub.s32 %s29, %s43
      %s176 = sor.u32 %s174, %s175
      %p177 = scmp.eq.s32.totalorder %s176, 0
      %s179 = sadd.s32 %s178, 1
      %s180 = scalar_select %p177, %s178, %s179
      %p183 = pneg %p177
      %p184 = scmp.eq.s32.totalorder %s21, 1
      %p185 = por %p183, %p184
      %p186 = scmp.ne.s32.totalorder %s178, %s181
      %p187 = scmp.eq.s32.totalorder %s21, 0
      %p188 = por %p186, %p187
      %p189 = scmp.ne.s32.totalorder %s178, %s181
      %p190 = scmp.eq.s32.totalorder %s26, 1
      %p191 = por %p189, %p190
      %p192 = scmp.ne.s32.totalorder %s181, %s182
      %p193 = scmp.eq.s32.totalorder %s26, 0
      %p194 = por %p192, %p193
      %p195 = scmp.ne.s32.totalorder %s181, %s182
      %p196 = scmp.eq.s32.totalorder %s27, 1
      %p197 = por %p195, %p196
      %p199 = scmp.ne.s32.totalorder %s182, %s198
      %p200 = scmp.eq.s32.totalorder %s27, 0
      %p201 = por %p199, %p200
      %p202 = scmp.le.s32.totalorder 1, %s21
      %p203 = scmp.lt.s32.totalorder %s21, 3
      %p204 = pnand %p202, %p203
      %p205 = pneg %p204
      // Predicated region
      $region9: #{tpu_custom_call.1} parent=5 // pred_check
        _
      $region10: #{tpu_custom_call.1} parent=5 // pred_check_branch
        %207 = sbr.rel (%p204) target = $region12
      $region11: #{tpu_custom_call.1} parent=5 // pred_region
        %s208 = ssub.s32 %s21, 1
        // Predicated region
        $region13: #{tpu_custom_call.1} parent=11 // pred_check
          %p209 = pneg %p145
        $region14: #{tpu_custom_call.1} parent=11 // pred_check_branch
          %211 = sbr.rel (%p209) target = $region16
        $region15: #{tpu_custom_call.1} parent=11 // pred_region
          %s213 = ssub.s32 2048, 2048
          %214 = vsyncadd [#allocation13], %s213
          %s215 = sshll.u32 [#allocation12], 4
          %s216 = int_to_ptr.vmem [resolvable:$true] %s215
          %221 = dma.hbm_to_vmem [thread:$0]  %s3, 2048, %s216, [#allocation13], 128, 128, 8
        $region16: #{tpu_custom_call.1} parent=11 // pred_fallthru
          _
        // Predicated region
        $region17: #{tpu_custom_call.1} parent=11 // pred_check
          %p222 = pneg %p166
        $region18: #{tpu_custom_call.1} parent=11 // pred_check_branch
          %224 = sbr.rel (%p222) target = $region20
        $region19: #{tpu_custom_call.1} parent=11 // pred_region
          %s226 = ssub.s32 2048, 2048
          %227 = vsyncadd [#allocation13], %s226
          %s228 = sshll.u32 [#allocation14], 4
          %s229 = int_to_ptr.vmem [resolvable:$true] %s228
          %234 = dma.hbm_to_vmem [thread:$0]  %s4, 2048, %s229, [#allocation13], 128, 128, 8
        $region20: #{tpu_custom_call.1} parent=11 // pred_fallthru
          _
      $region12: #{tpu_custom_call.1} parent=5 // pred_fallthru
        _
      %p235 = scmp.lt.s32.totalorder %s21, 2
      // Predicated region
      $region21: #{tpu_custom_call.1} parent=5 // pred_check
        %p236 = pneg %p235
      $region22: #{tpu_custom_call.1} parent=5 // pred_check_branch
        %238 = sbr.rel (%p236) target = $region24
      $region23: #{tpu_custom_call.1} parent=5 // pred_region
        // Predicated region
        $region25: #{tpu_custom_call.1} parent=23 // pred_check
          %p239 = pneg %p62
        $region26: #{tpu_custom_call.1} parent=23 // pred_check_branch
          %241 = sbr.rel (%p239) target = $region28
        $region27: #{tpu_custom_call.1} parent=23 // pred_region
          %s242 = sand.u32 %s52, 1
          %s243 = scalar_lea.sflag [#allocation7], %s242
          %s244 = sand.u32 %s52, 1
          %s245 = smul.addr %s244, 16
          %s246 = scalar_lea.vmem [#allocation6], %s245
          %s247 = smul.u32 2, %s29
          %s249 = ssub.s32 256, 256
          %250 = vsyncadd %s243, %s249
          %s251 = smul.addr %s28, 2
          %s252 = sadd.s32 %s247, %s251
          %s253 = smul.addr %s252, 128
          %s254 = scalar_lea.hbm %s0, %s253
          %s255 = sshll.u32 %s246, 4
          %s256 = int_to_ptr.vmem [resolvable:$true] %s255
          %261 = dma.hbm_to_vmem [thread:$0]  %s254, 256, %s256, %s243, 128, 128, 8
        $region28: #{tpu_custom_call.1} parent=23 // pred_fallthru
          _
        // Predicated region
        $region29: #{tpu_custom_call.1} parent=23 // pred_check
          %p262 = pneg %p90
        $region30: #{tpu_custom_call.1} parent=23 // pred_check_branch
          %264 = sbr.rel (%p262) target = $region32
        $region31: #{tpu_custom_call.1} parent=23 // pred_region
          %s265 = sand.u32 %s21, 1
          %s266 = scalar_lea.sflag [#allocation10], %s265
          %s267 = sand.u32 %s80, 1
          %s268 = smul.addr %s267, 16
          %s269 = scalar_lea.vmem [#allocation9], %s268
          %s270 = smul.u32 2, %s30
          %s272 = ssub.s32 256, 256
          %273 = vsyncadd %s266, %s272
          %s274 = smul.addr %s28, 2
          %s275 = sadd.s32 %s270, %s274
          %s276 = smul.addr %s275, 128
          %s277 = scalar_lea.hbm %s1, %s276
          %s278 = sshll.u32 %s269, 4
          %s279 = int_to_ptr.vmem [resolvable:$true] %s278
          %284 = dma.hbm_to_vmem [thread:$0]  %s277, 256, %s279, %s266, 128, 128, 8
        $region32: #{tpu_custom_call.1} parent=23 // pred_fallthru
          _
        // Predicated region
        $region33: #{tpu_custom_call.1} parent=23 // pred_check
          %p285 = pneg %p118
        $region34: #{tpu_custom_call.1} parent=23 // pred_check_branch
          %287 = sbr.rel (%p285) target = $region36
        $region35: #{tpu_custom_call.1} parent=23 // pred_region
          %s288 = sand.u32 %s21, 1
          %s289 = scalar_lea.sflag [#allocation10], %s288
          %s290 = sand.u32 %s108, 1
          %s291 = smul.addr %s290, 16
          %s292 = scalar_lea.vmem [#allocation11], %s291
          %s293 = smul.u32 2, %s30
          %s295 = ssub.s32 256, 256
          %296 = vsyncadd %s289, %s295
          %s297 = smul.addr %s28, 2
          %s298 = sadd.s32 %s293, %s297
          %s299 = smul.addr %s298, 128
          %s300 = scalar_lea.hbm %s2, %s299
          %s301 = sshll.u32 %s292, 4
          %s302 = int_to_ptr.vmem [resolvable:$true] %s301
          %307 = dma.hbm_to_vmem [thread:$0]  %s300, 256, %s302, %s289, 128, 128, 8
        $region36: #{tpu_custom_call.1} parent=23 // pred_fallthru
          _
      $region24: #{tpu_custom_call.1} parent=5 // pred_fallthru
        _
      %p308 = scmp.le.s32.totalorder 1, %s21
      %p309 = scmp.lt.s32.totalorder %s21, 3
      %p310 = pnand %p308, %p309
      %p311 = pneg %p310
      // Predicated region
      $region37: #{tpu_custom_call.1} parent=5 // pred_check
        _
      $region38: #{tpu_custom_call.1} parent=5 // pred_check_branch
        %313 = sbr.rel (%p310) target = $region40
      $region39: #{tpu_custom_call.1} parent=5 // pred_region
        %s314 = ssub.s32 %s21, 1
        %s315 = sand.u32 %s55, 1
        %s316 = scalar_lea.sflag [#allocation7], %s315
        %s317 = sand.u32 %s55, 1
        %s318 = smul.addr %s317, 16
        %s319 = scalar_lea.vmem [#allocation6], %s318
        // Predicated region
        $region41: #{tpu_custom_call.1} parent=39 // pred_check
          %p320 = pneg %p68
        $region42: #{tpu_custom_call.1} parent=39 // pred_check_branch
          %322 = sbr.rel (%p320) target = $region44
        $region43: #{tpu_custom_call.1} parent=39 // pred_region
          %323 = dma.done %s316, 256
        $region44: #{tpu_custom_call.1} parent=39 // pred_fallthru
          _
        %s324 = sand.u32 %s26, 1
        %s325 = scalar_lea.sflag [#allocation10], %s324
        %s326 = sand.u32 %s83, 1
        %s327 = smul.addr %s326, 16
        %s328 = scalar_lea.vmem [#allocation9], %s327
        // Predicated region
        $region45: #{tpu_custom_call.1} parent=39 // pred_check
          %p329 = pneg %p96
        $region46: #{tpu_custom_call.1} parent=39 // pred_check_branch
          %331 = sbr.rel (%p329) target = $region48
        $region47: #{tpu_custom_call.1} parent=39 // pred_region
          %332 = dma.done %s325, 256
        $region48: #{tpu_custom_call.1} parent=39 // pred_fallthru
          _
        %s333 = sand.u32 %s26, 1
        %s334 = scalar_lea.sflag [#allocation10], %s333
        %s335 = sand.u32 %s111, 1
        %s336 = smul.addr %s335, 16
        %s337 = scalar_lea.vmem [#allocation11], %s336
        // Predicated region
        $region49: #{tpu_custom_call.1} parent=39 // pred_check
          %p338 = pneg %p124
        $region50: #{tpu_custom_call.1} parent=39 // pred_check_branch
          %340 = sbr.rel (%p338) target = $region52
        $region51: #{tpu_custom_call.1} parent=39 // pred_region
          %341 = dma.done %s334, 256
        $region52: #{tpu_custom_call.1} parent=39 // pred_fallthru
          _
        // Predicated region
        $region53: #{tpu_custom_call.1} parent=39 // pred_check
          %p342 = pneg %p145
        $region54: #{tpu_custom_call.1} parent=39 // pred_check_branch
          %344 = sbr.rel (%p342) target = $region56
        $region55: #{tpu_custom_call.1} parent=39 // pred_region
          %345 = dma.done [#allocation13], 2048
        $region56: #{tpu_custom_call.1} parent=39 // pred_fallthru
          _
        // Predicated region
        $region57: #{tpu_custom_call.1} parent=39 // pred_check
          %p346 = pneg %p166
        $region58: #{tpu_custom_call.1} parent=39 // pred_check_branch
          %348 = sbr.rel (%p346) target = $region60
        $region59: #{tpu_custom_call.1} parent=39 // pred_region
          %349 = dma.done [#allocation13], 2048
        $region60: #{tpu_custom_call.1} parent=39 // pred_fallthru
          _
        %s350 = sand.u32 %s55, 1
        %s351 = scalar_lea.sflag [#allocation7], %s350
        %s352 = sand.u32 %s55, 1
        %s353 = smul.addr %s352, 16
        %s354 = scalar_lea.vmem [#allocation6], %s353
        %p355 = pneg %p68
        %p356 = pneg %p65
        %s357 = sand.u32 %s26, 1
        %s358 = scalar_lea.sflag [#allocation10], %s357
        %s359 = sand.u32 %s83, 1
        %s360 = smul.addr %s359, 16
        %s361 = scalar_lea.vmem [#allocation9], %s360
        %p362 = pneg %p96
        %p363 = pneg %p93
        %s364 = sand.u32 %s26, 1
        %s365 = scalar_lea.sflag [#allocation10], %s364
        %s366 = sand.u32 %s111, 1
        %s367 = smul.addr %s366, 16
        %s368 = scalar_lea.vmem [#allocation11], %s367
        %p369 = pneg %p124
        %p370 = pneg %p121
        %p371 = pneg %p145
        %p372 = pneg %p142
        %p373 = pneg %p166
        %p374 = pneg %p163
        %p375 = pneg %p194
        %p376 = pneg %p191
        %s377 = sand.u32 %s181, 1
        %s378 = scalar_lea.sflag [#allocation8], %s377
        %s379 = sand.u32 %s181, 1
        %s380 = smul.addr %s379, 16
        %s381 = scalar_lea.vmem [#allocation15], %s380
        %s382 = smul.u32 2, %s32
        %s383 = smul.u32 2, %s33
        %s384 = smul.u32 2, %s33
        %s385 = smul.u32 2, %s32
        %p386 = scmp.eq.s32.totalorder %s33, 0
        // Predicated region
        $region61: #{tpu_custom_call.1} parent=39 // pred_check
          %p387 = pneg %p386
        $region62: #{tpu_custom_call.1} parent=39 // pred_check_branch
          %389 = sbr.rel (%p387) target = $region64
        $region63: #{tpu_custom_call.1} parent=39 // pred_region
          %vm390 = vcmask 7168
          %391 = vst.msk [vmem:[#allocation2] sm:$0xff] %vm390, -inf
          %392 = vst.msk [vmem:[#allocation2 + $0x8] sm:$0xff] %vm390, -inf
          %393 = vst.msk [vmem:[#allocation3] sm:$0xff] %vm390, 0.0
          %394 = vst.msk [vmem:[#allocation3 + $0x8] sm:$0xff] %vm390, 0.0
          %395 = vst [vmem:[#allocation4] sm:$0xff] 0.0
          %396 = vst [vmem:[#allocation4 + $0x8] sm:$0xff] 0.0
          %v397 = vld [vmem:[%s319] sm:$0xff]
          %v398 = vld [vmem:[%s319 + $0x8] sm:$0xff]
          %v399 = vld [vmem:[#allocation12] sm:$0xff]
          %v400 = vld [vmem:[#allocation12 + $0x8] sm:$0xff]
          %v401 = vld [vmem:[#allocation12 + $0x10] sm:$0xff]
          %v402 = vld [vmem:[#allocation12 + $0x18] sm:$0xff]
          %v403 = vld [vmem:[#allocation12 + $0x20] sm:$0xff]
          %v404 = vld [vmem:[#allocation12 + $0x28] sm:$0xff]
          %v405 = vld [vmem:[#allocation12 + $0x30] sm:$0xff]
          %v406 = vld [vmem:[#allocation12 + $0x38] sm:$0xff]
          %v407 = vld [vmem:[#allocation12 + $0x40] sm:$0xff]
          %v408 = vld [vmem:[#allocation12 + $0x48] sm:$0xff]
          %v409 = vld [vmem:[#allocation12 + $0x50] sm:$0xff]
          %v410 = vld [vmem:[#allocation12 + $0x58] sm:$0xff]
          %v411 = vld [vmem:[#allocation12 + $0x60] sm:$0xff]
          %v412 = vld [vmem:[#allocation12 + $0x68] sm:$0xff]
          %v413 = vld [vmem:[#allocation12 + $0x70] sm:$0xff]
          %v414 = vld [vmem:[#allocation12 + $0x78] sm:$0xff]
          %415 = vmatprep.subr.mxu0 0.0
          %416 = vmatpush1.msra.mxu0 %v414
          %417 = vmatprep.subr.mxu0 0.0
          %418 = vmatpush1.msra.mxu0 %v413
          %419 = vmatprep.subr.mxu0 0.0
          %420 = vmatpush1.msra.mxu0 %v412
          %421 = vmatprep.subr.mxu0 0.0
          %422 = vmatpush1.msra.mxu0 %v411
          %423 = vmatprep.subr.mxu0 0.0
          %424 = vmatpush1.msra.mxu0 %v410
          %425 = vmatprep.subr.mxu0 0.0
          %426 = vmatpush1.msra.mxu0 %v409
          %427 = vmatprep.subr.mxu0 0.0
          %428 = vmatpush1.msra.mxu0 %v408
          %429 = vmatprep.subr.mxu0 0.0
          %430 = vmatpush1.msra.mxu0 %v407
          %431 = vmatprep.subr.mxu0 0.0
          %432 = vmatpush1.msra.mxu0 %v406
          %433 = vmatprep.subr.mxu0 0.0
          %434 = vmatpush1.msra.mxu0 %v405
          %435 = vmatprep.subr.mxu0 0.0
          %436 = vmatpush1.msra.mxu0 %v404
          %437 = vmatprep.subr.mxu0 0.0
          %438 = vmatpush1.msra.mxu0 %v403
          %439 = vmatprep.subr.mxu0 0.0
          %440 = vmatpush1.msra.mxu0 %v402
          %441 = vmatprep.subr.mxu0 0.0
          %442 = vmatpush1.msra.mxu0 %v401
          %443 = vmatprep.subr.mxu0 0.0
          %444 = vmatpush1.msra.mxu0 %v400
          %445 = vmatprep.subr.mxu0 0.0
          %446 = vmatpush1.msra.mxu0 %v399
          %447 = vmatprep.subr.mxu0 0.0
          %448 = vmatpush2.msra.mxu0 0.0
          %449 = vmatprep.subr.mxu0 0.0
          %450 = vmatpush2.msra.mxu0 0.0
          %451 = vmatprep.subr.mxu0 0.0
          %452 = vmatpush2.msra.mxu0 0.0
          %453 = vmatprep.subr.mxu0 0.0
          %454 = vmatpush2.msra.mxu0 0.0
          %455 = vmatprep.subr.mxu0 0.0
          %456 = vmatpush2.msra.mxu0 0.0
          %457 = vmatprep.subr.mxu0 0.0
          %458 = vmatpush2.msra.mxu0 0.0
          %459 = vmatprep.subr.mxu0 0.0
          %460 = vmatpush2.msra.mxu0 0.0
          %461 = vmatprep.subr.mxu0 0.0
          %462 = vmatpush2.msra.mxu0 0.0
          %463 = vmatprep.subr.mxu0 0.0
          %464 = vmatpush2.msra.mxu0 0.0
          %465 = vmatprep.subr.mxu0 0.0
          %466 = vmatpush2.msra.mxu0 0.0
          %467 = vmatprep.subr.mxu0 0.0
          %468 = vmatpush2.msra.mxu0 0.0
          %469 = vmatprep.subr.mxu0 0.0
          %470 = vmatpush2.msra.mxu0 0.0
          %471 = vmatprep.subr.mxu0 0.0
          %472 = vmatpush2.msra.mxu0 0.0
          %473 = vmatprep.subr.mxu0 0.0
          %474 = vmatpush2.msra.mxu0 0.0
          %475 = vmatprep.subr.mxu0 0.0
          %476 = vmatpush2.msra.mxu0 0.0
          %477 = vmatprep.subr.mxu0 0.0
          %478 = vmatpush2.msra.mxu0 0.0
          %479 = vmatprep.mubr.f32.mxu0 0.0
          %480 = vmatmul.mubr.f32.gmra.mxu0 %v397
          %v481 = vpop.f32.mrf.mxu0
          %v482 = vadd.f32 0.0, %v481
          %v483 = vpop.f32.mrf.mxu0
          %484 = vmatprep.mubr.f32.mxu0 0.0
          %485 = vmatmul.mubr.f32.gmra.mxu0 %v398
          %v486 = vpop.f32.mrf.mxu0
          %v487 = vadd.f32 0.0, %v486
          %v488 = vpop.f32.mrf.mxu0
          %489 = vdwg.mxu0
          %490 = vst [vmem:[#allocation5] sm:$0xff] %v482
          %491 = vst [vmem:[#allocation5 + $0x8] sm:$0xff] %v487
        $region64: #{tpu_custom_call.1} parent=39 // pred_fallthru
          _
        %v492 = vld [vmem:[#allocation5] sm:$0xff]
        %v493 = vld [vmem:[#allocation5 + $0x8] sm:$0xff]
        %v494 = vld [vmem:[%s328] sm:$0xff]
        %v495 = vld [vmem:[%s328 + $0x8] sm:$0xff]
        %v496 = vld [vmem:[%s337] sm:$0xff]
        %v497 = vld [vmem:[%s337 + $0x8] sm:$0xff]
        %498 = vmatprep.subr.mxu0 0.0
        %499 = vmatpush1.xpose.msra.mxu0 0.0
        %500 = vmatprep.subr.mxu0 0.0
        %501 = vmatpush1.xpose.msra.mxu0 0.0
        %502 = vmatprep.subr.mxu0 0.0
        %503 = vmatpush1.xpose.msra.mxu0 0.0
        %504 = vmatprep.subr.mxu0 0.0
        %505 = vmatpush1.xpose.msra.mxu0 0.0
        %506 = vmatprep.subr.mxu0 0.0
        %507 = vmatpush1.xpose.msra.mxu0 0.0
        %508 = vmatprep.subr.mxu0 0.0
        %509 = vmatpush1.xpose.msra.mxu0 0.0
        %510 = vmatprep.subr.mxu0 0.0
        %511 = vmatpush1.xpose.msra.mxu0 0.0
        %512 = vmatprep.subr.mxu0 0.0
        %513 = vmatpush1.xpose.msra.mxu0 0.0
        %514 = vmatprep.subr.mxu0 0.0
        %515 = vmatpush1.xpose.msra.mxu0 0.0
        %516 = vmatprep.subr.mxu0 0.0
        %517 = vmatpush1.xpose.msra.mxu0 0.0
        %518 = vmatprep.subr.mxu0 0.0
        %519 = vmatpush1.xpose.msra.mxu0 0.0
        %520 = vmatprep.subr.mxu0 0.0
        %521 = vmatpush1.xpose.msra.mxu0 0.0
        %522 = vmatprep.subr.mxu0 0.0
        %523 = vmatpush1.xpose.msra.mxu0 0.0
        %524 = vmatprep.subr.mxu0 0.0
        %525 = vmatpush1.xpose.msra.mxu0 0.0
        %526 = vmatprep.subr.mxu0 0.0
        %527 = vmatpush1.xpose.msra.mxu0 %v495
        %528 = vmatprep.subr.mxu0 0.0
        %529 = vmatpush1.xpose.msra.mxu0 %v494
        %530 = vmatprep.subr.mxu0 0.0
        %531 = vmatpush2.xpose.msra.mxu0 0.0
        %532 = vmatprep.subr.mxu0 0.0
        %533 = vmatpush2.xpose.msra.mxu0 0.0
        %534 = vmatprep.subr.mxu0 0.0
        %535 = vmatpush2.xpose.msra.mxu0 0.0
        %536 = vmatprep.subr.mxu0 0.0
        %537 = vmatpush2.xpose.msra.mxu0 0.0
        %538 = vmatprep.subr.mxu0 0.0
        %539 = vmatpush2.xpose.msra.mxu0 0.0
        %540 = vmatprep.subr.mxu0 0.0
        %541 = vmatpush2.xpose.msra.mxu0 0.0
        %542 = vmatprep.subr.mxu0 0.0
        %543 = vmatpush2.xpose.msra.mxu0 0.0
        %544 = vmatprep.subr.mxu0 0.0
        %545 = vmatpush2.xpose.msra.mxu0 0.0
        %546 = vmatprep.subr.mxu0 0.0
        %547 = vmatpush2.xpose.msra.mxu0 0.0
        %548 = vmatprep.subr.mxu0 0.0
        %549 = vmatpush2.xpose.msra.mxu0 0.0
        %550 = vmatprep.subr.mxu0 0.0
        %551 = vmatpush2.xpose.msra.mxu0 0.0
        %552 = vmatprep.subr.mxu0 0.0
        %553 = vmatpush2.xpose.msra.mxu0 0.0
        %554 = vmatprep.subr.mxu0 0.0
        %555 = vmatpush2.xpose.msra.mxu0 0.0
        %556 = vmatprep.subr.mxu0 0.0
        %557 = vmatpush2.xpose.msra.mxu0 0.0
        %558 = vmatprep.subr.mxu0 0.0
        %559 = vmatpush2.xpose.msra.mxu0 0.0
        %560 = vmatprep.subr.mxu0 0.0
        %561 = vmatpush2.xpose.msra.mxu0 0.0
        %562 = vmatprep.mubr.f32.mxu0 0.0
        %563 = vmatmul.mubr.f32.gmra.mxu0 %v492
        %v564 = vpop.f32.mrf.mxu0
        %v565 = vadd.f32 0.0, %v564
        %v566 = vpop.f32.mrf.mxu0
        %567 = vmatprep.mubr.f32.mxu0 0.0
        %568 = vmatmul.mubr.f32.gmra.mxu0 %v493
        %v569 = vpop.f32.mrf.mxu0
        %v570 = vadd.f32 0.0, %v569
        %v571 = vpop.f32.mrf.mxu0
        %572 = vdwg.mxu0
        %v573 = vlaneseq
        %v574 = vand.u32 %v573, 127
        %vm575 = vcmp.lt.s32.totalorder %v574, 8
        %v576 = vsel %vm575, %v565, -inf
        %v577 = vsel %vm575, %v570, -inf
        %v578 = vld [vmem:[#allocation2] sm:$0xff]
        %v579 = vld [vmem:[#allocation2 + $0x8] sm:$0xff]
        %vm580 = vcmask 130048
        %v581 = vsel %vm580, %v576, -inf
        %582 = vmax.xlane.f32.xlu0 %v581
        %v583 = vpop.xlane.xlu0 %582
        %v584 = vsel %vm580, %v577, -inf
        %585 = vmax.xlane.f32.xlu0 %v584
        %v586 = vpop.xlane.xlu0 %585
        %v587 = vmax.f32 %v578, %v583
        %v588 = vmax.f32 %v579, %v586
        %v589 = vsub.f32 %v578, %v587
        %v590 = vsub.f32 %v579, %v588
        %v591 = vmul.f32 %v589, 1.442695
        %v592 = vpow.pop %v591
        %v593 = vmul.f32 %v590, 1.442695
        %v594 = vpow.pop %v593
        %596 = vset.pattern.permute.xlu0 0
        %597 = vperm.xlu0 %596, %v587
        %v598 = vpop.permute.xlu0 %597
        %601 = vset.pattern.permute.xlu0 0
        %602 = vperm.xlu0 %601, %v588
        %v603 = vpop.permute.xlu0 %602
        %v605 = vsub.f32 %v576, %v598
        %v606 = vsub.f32 %v577, %v603
        %v607 = vmul.f32 %v605, 1.442695
        %v608 = vpow.pop %v607
        %v609 = vmul.f32 %v606, 1.442695
        %v610 = vpow.pop %v609
        %v611 = vld [vmem:[#allocation3] sm:$0xff]
        %v612 = vld [vmem:[#allocation3 + $0x8] sm:$0xff]
        %v613 = vmul.f32 %v592, %v611
        %v614 = vmul.f32 %v594, %v612
        %v615 = vsel %vm580, %v608, 0.0
        %616 = vadd.xlane.f32.xlu0 %v615
        %v617 = vpop.xlane.xlu0 %616
        %v618 = vsel %vm580, %v610, 0.0
        %619 = vadd.xlane.f32.xlu0 %v618
        %v620 = vpop.xlane.xlu0 %619
        %v621 = vadd.f32 %v613, %v617
        %v622 = vadd.f32 %v614, %v620
        %vm623 = vcmask 7168
        %624 = vst.msk [vmem:[#allocation3] sm:$0xff] %vm623, %v621
        %625 = vst.msk [vmem:[#allocation3 + $0x8] sm:$0xff] %vm623, %v622
        %v626 = vld [vmem:[#allocation4] sm:$0xff]
        %v627 = vld [vmem:[#allocation4 + $0x8] sm:$0xff]
        %629 = vset.pattern.permute.xlu0 0
        %630 = vperm.xlu0 %629, %v592
        %v631 = vpop.permute.xlu0 %630
        %634 = vset.pattern.permute.xlu0 0
        %635 = vperm.xlu0 %634, %v594
        %v636 = vpop.permute.xlu0 %635
        %v638 = vmul.f32 %v631, %v626
        %v639 = vmul.f32 %v636, %v627
        %v641 = vsel %vm580, %v608, 0
        %v644 = vsel %vm580, %v610, 0
        %646 = vmatprep.subr.mxu0 0.0
        %647 = vmatpush1.msra.mxu0 0.0
        %648 = vmatprep.subr.mxu0 0.0
        %649 = vmatpush1.msra.mxu0 0.0
        %650 = vmatprep.subr.mxu0 0.0
        %651 = vmatpush1.msra.mxu0 0.0
        %652 = vmatprep.subr.mxu0 0.0
        %653 = vmatpush1.msra.mxu0 0.0
        %654 = vmatprep.subr.mxu0 0.0
        %655 = vmatpush1.msra.mxu0 0.0
        %656 = vmatprep.subr.mxu0 0.0
        %657 = vmatpush1.msra.mxu0 0.0
        %658 = vmatprep.subr.mxu0 0.0
        %659 = vmatpush1.msra.mxu0 0.0
        %660 = vmatprep.subr.mxu0 0.0
        %661 = vmatpush1.msra.mxu0 0.0
        %662 = vmatprep.subr.mxu0 0.0
        %663 = vmatpush1.msra.mxu0 0.0
        %664 = vmatprep.subr.mxu0 0.0
        %665 = vmatpush1.msra.mxu0 0.0
        %666 = vmatprep.subr.mxu0 0.0
        %667 = vmatpush1.msra.mxu0 0.0
        %668 = vmatprep.subr.mxu0 0.0
        %669 = vmatpush1.msra.mxu0 0.0
        %670 = vmatprep.subr.mxu0 0.0
        %671 = vmatpush1.msra.mxu0 0.0
        %672 = vmatprep.subr.mxu0 0.0
        %673 = vmatpush1.msra.mxu0 0.0
        %674 = vmatprep.subr.mxu0 0.0
        %675 = vmatpush1.msra.mxu0 %v497
        %676 = vmatprep.subr.mxu0 0.0
        %677 = vmatpush1.msra.mxu0 %v496
        %678 = vmatprep.subr.mxu0 0.0
        %679 = vmatpush2.msra.mxu0 0.0
        %680 = vmatprep.subr.mxu0 0.0
        %681 = vmatpush2.msra.mxu0 0.0
        %682 = vmatprep.subr.mxu0 0.0
        %683 = vmatpush2.msra.mxu0 0.0
        %684 = vmatprep.subr.mxu0 0.0
        %685 = vmatpush2.msra.mxu0 0.0
        %686 = vmatprep.subr.mxu0 0.0
        %687 = vmatpush2.msra.mxu0 0.0
        %688 = vmatprep.subr.mxu0 0.0
        %689 = vmatpush2.msra.mxu0 0.0
        %690 = vmatprep.subr.mxu0 0.0
        %691 = vmatpush2.msra.mxu0 0.0
        %692 = vmatprep.subr.mxu0 0.0
        %693 = vmatpush2.msra.mxu0 0.0
        %694 = vmatprep.subr.mxu0 0.0
        %695 = vmatpush2.msra.mxu0 0.0
        %696 = vmatprep.subr.mxu0 0.0
        %697 = vmatpush2.msra.mxu0 0.0
        %698 = vmatprep.subr.mxu0 0.0
        %699 = vmatpush2.msra.mxu0 0.0
        %700 = vmatprep.subr.mxu0 0.0
        %701 = vmatpush2.msra.mxu0 0.0
        %702 = vmatprep.subr.mxu0 0.0
        %703 = vmatpush2.msra.mxu0 0.0
        %704 = vmatprep.subr.mxu0 0.0
        %705 = vmatpush2.msra.mxu0 0.0
        %706 = vmatprep.subr.mxu0 0.0
        %707 = vmatpush2.msra.mxu0 0.0
        %708 = vmatprep.subr.mxu0 0.0
        %709 = vmatpush2.msra.mxu0 0.0
        %710 = vmatprep.mubr.f32.mxu0 0.0
        %711 = vmatmul.mubr.f32.gmra.mxu0 %v641
        %v712 = vpop.f32.mrf.mxu0
        %v713 = vadd.f32 0.0, %v712
        %v714 = vpop.f32.mrf.mxu0
        %715 = vmatprep.mubr.f32.mxu0 0.0
        %716 = vmatmul.mubr.f32.gmra.mxu0 %v644
        %v717 = vpop.f32.mrf.mxu0
        %v718 = vadd.f32 0.0, %v717
        %v719 = vpop.f32.mrf.mxu0
        %720 = vdwg.mxu0
        %v721 = vadd.f32 %v638, %v713
        %v722 = vadd.f32 %v639, %v718
        %723 = vst [vmem:[#allocation4] sm:$0xff] %v721
        %724 = vst [vmem:[#allocation4 + $0x8] sm:$0xff] %v722
        %725 = vst.msk [vmem:[#allocation2] sm:$0xff] %vm623, %v587
        %726 = vst.msk [vmem:[#allocation2 + $0x8] sm:$0xff] %vm623, %v588
        // Predicated region
        $region65: #{tpu_custom_call.1} parent=39 // pred_check
          %p727 = pneg %p386
        $region66: #{tpu_custom_call.1} parent=39 // pred_check_branch
          %729 = sbr.rel (%p727) target = $region68
        $region67: #{tpu_custom_call.1} parent=39 // pred_region
          %v730 = vld [vmem:[#allocation3] sm:$0xff]
          %v731 = vld [vmem:[#allocation3 + $0x8] sm:$0xff]
          %v732 = vrcp.pop %v730
          %v733 = vrcp.pop %v731
          %v734 = vld [vmem:[#allocation4] sm:$0xff]
          %v735 = vld [vmem:[#allocation4 + $0x8] sm:$0xff]
          %737 = vset.pattern.permute.xlu0 0
          %738 = vperm.xlu0 %737, %v732
          %v739 = vpop.permute.xlu0 %738
          %742 = vset.pattern.permute.xlu0 0
          %743 = vperm.xlu0 %742, %v733
          %v744 = vpop.permute.xlu0 %743
          %v746 = vmul.f32 %v734, %v739
          %v747 = vmul.f32 %v735, %v744
          %v748 = vld [vmem:[#allocation14] sm:$0xff]
          %v749 = vld [vmem:[#allocation14 + $0x8] sm:$0xff]
          %v750 = vld [vmem:[#allocation14 + $0x10] sm:$0xff]
          %v751 = vld [vmem:[#allocation14 + $0x18] sm:$0xff]
          %v752 = vld [vmem:[#allocation14 + $0x20] sm:$0xff]
          %v753 = vld [vmem:[#allocation14 + $0x28] sm:$0xff]
          %v754 = vld [vmem:[#allocation14 + $0x30] sm:$0xff]
          %v755 = vld [vmem:[#allocation14 + $0x38] sm:$0xff]
          %v756 = vld [vmem:[#allocation14 + $0x40] sm:$0xff]
          %v757 = vld [vmem:[#allocation14 + $0x48] sm:$0xff]
          %v758 = vld [vmem:[#allocation14 + $0x50] sm:$0xff]
          %v759 = vld [vmem:[#allocation14 + $0x58] sm:$0xff]
          %v760 = vld [vmem:[#allocation14 + $0x60] sm:$0xff]
          %v761 = vld [vmem:[#allocation14 + $0x68] sm:$0xff]
          %v762 = vld [vmem:[#allocation14 + $0x70] sm:$0xff]
          %v763 = vld [vmem:[#allocation14 + $0x78] sm:$0xff]
          %764 = vmatprep.subr.mxu0 0.0
          %765 = vmatpush1.msra.mxu0 %v763
          %766 = vmatprep.subr.mxu0 0.0
          %767 = vmatpush1.msra.mxu0 %v762
          %768 = vmatprep.subr.mxu0 0.0
          %769 = vmatpush1.msra.mxu0 %v761
          %770 = vmatprep.subr.mxu0 0.0
          %771 = vmatpush1.msra.mxu0 %v760
          %772 = vmatprep.subr.mxu0 0.0
          %773 = vmatpush1.msra.mxu0 %v759
          %774 = vmatprep.subr.mxu0 0.0
          %775 = vmatpush1.msra.mxu0 %v758
          %776 = vmatprep.subr.mxu0 0.0
          %777 = vmatpush1.msra.mxu0 %v757
          %778 = vmatprep.subr.mxu0 0.0
          %779 = vmatpush1.msra.mxu0 %v756
          %780 = vmatprep.subr.mxu0 0.0
          %781 = vmatpush1.msra.mxu0 %v755
          %782 = vmatprep.subr.mxu0 0.0
          %783 = vmatpush1.msra.mxu0 %v754
          %784 = vmatprep.subr.mxu0 0.0
          %785 = vmatpush1.msra.mxu0 %v753
          %786 = vmatprep.subr.mxu0 0.0
          %787 = vmatpush1.msra.mxu0 %v752
          %788 = vmatprep.subr.mxu0 0.0
          %789 = vmatpush1.msra.mxu0 %v751
          %790 = vmatprep.subr.mxu0 0.0
          %791 = vmatpush1.msra.mxu0 %v750
          %792 = vmatprep.subr.mxu0 0.0
          %793 = vmatpush1.msra.mxu0 %v749
          %794 = vmatprep.subr.mxu0 0.0
          %795 = vmatpush1.msra.mxu0 %v748
          %796 = vmatprep.subr.mxu0 0.0
          %797 = vmatpush2.msra.mxu0 0.0
          %798 = vmatprep.subr.mxu0 0.0
          %799 = vmatpush2.msra.mxu0 0.0
          %800 = vmatprep.subr.mxu0 0.0
          %801 = vmatpush2.msra.mxu0 0.0
          %802 = vmatprep.subr.mxu0 0.0
          %803 = vmatpush2.msra.mxu0 0.0
          %804 = vmatprep.subr.mxu0 0.0
          %805 = vmatpush2.msra.mxu0 0.0
          %806 = vmatprep.subr.mxu0 0.0
          %807 = vmatpush2.msra.mxu0 0.0
          %808 = vmatprep.subr.mxu0 0.0
          %809 = vmatpush2.msra.mxu0 0.0
          %810 = vmatprep.subr.mxu0 0.0
          %811 = vmatpush2.msra.mxu0 0.0
          %812 = vmatprep.subr.mxu0 0.0
          %813 = vmatpush2.msra.mxu0 0.0
          %814 = vmatprep.subr.mxu0 0.0
          %815 = vmatpush2.msra.mxu0 0.0
          %816 = vmatprep.subr.mxu0 0.0
          %817 = vmatpush2.msra.mxu0 0.0
          %818 = vmatprep.subr.mxu0 0.0
          %819 = vmatpush2.msra.mxu0 0.0
          %820 = vmatprep.subr.mxu0 0.0
          %821 = vmatpush2.msra.mxu0 0.0
          %822 = vmatprep.subr.mxu0 0.0
          %823 = vmatpush2.msra.mxu0 0.0
          %824 = vmatprep.subr.mxu0 0.0
          %825 = vmatpush2.msra.mxu0 0.0
          %826 = vmatprep.subr.mxu0 0.0
          %827 = vmatpush2.msra.mxu0 0.0
          %828 = vmatprep.mubr.f32.mxu0 0.0
          %829 = vmatmul.mubr.f32.gmra.mxu0 %v746
          %v830 = vpop.f32.mrf.mxu0
          %v831 = vadd.f32 0.0, %v830
          %v832 = vpop.f32.mrf.mxu0
          %833 = vmatprep.mubr.f32.mxu0 0.0
          %834 = vmatmul.mubr.f32.gmra.mxu0 %v747
          %v835 = vpop.f32.mrf.mxu0
          %v836 = vadd.f32 0.0, %v835
          %v837 = vpop.f32.mrf.mxu0
          %838 = vdwg.mxu0
          %839 = vst [vmem:[%s381] sm:$0xff] %v831
          %840 = vst [vmem:[%s381 + $0x8] sm:$0xff] %v836
        $region68: #{tpu_custom_call.1} parent=39 // pred_fallthru
          _
        %s841 = sand.u32 %s181, 1
        %s842 = scalar_lea.sflag [#allocation8], %s841
        %s843 = sand.u32 %s181, 1
        %s844 = smul.addr %s843, 16
        %s845 = scalar_lea.vmem [#allocation15], %s844
        // Predicated region
        $region69: #{tpu_custom_call.1} parent=39 // pred_check
          %p846 = pneg %p191
        $region70: #{tpu_custom_call.1} parent=39 // pred_check_branch
          %848 = sbr.rel (%p846) target = $region72
        $region71: #{tpu_custom_call.1} parent=39 // pred_region
          %s849 = smul.u32 2, %s32
          %s851 = ssub.s32 256, 256
          %852 = vsyncadd %s842, %s851
          %s853 = smul.addr %s31, 2
          %s854 = sadd.s32 %s849, %s853
          %s855 = smul.addr %s854, 128
          %s856 = scalar_lea.hbm %s5, %s855
          %s857 = sshll.u32 %s845, 4
          %s858 = int_to_ptr.vmem [resolvable:$true] %s857
          %863 = dma.vmem_to_hbm [thread:$0]  %s858, 256, %s856, %s842, 128, 128, 8
        $region72: #{tpu_custom_call.1} parent=39 // pred_fallthru
          _
      $region40: #{tpu_custom_call.1} parent=5 // pred_fallthru
        _
      %p864 = scmp.le.s32.totalorder 2, %s21
      // Predicated region
      $region73: #{tpu_custom_call.1} parent=5 // pred_check
        %p865 = pneg %p864
      $region74: #{tpu_custom_call.1} parent=5 // pred_check_branch
        %867 = sbr.rel (%p865) target = $region76
      $region75: #{tpu_custom_call.1} parent=5 // pred_region
        %s868 = ssub.s32 %s21, 2
        // Predicated region
        $region77: #{tpu_custom_call.1} parent=75 // pred_check
          %p869 = pneg %p197
        $region78: #{tpu_custom_call.1} parent=75 // pred_check_branch
          %871 = sbr.rel (%p869) target = $region80
        $region79: #{tpu_custom_call.1} parent=75 // pred_region
          %s872 = sand.u32 %s182, 1
          %s873 = scalar_lea.sflag [#allocation8], %s872
          %s874 = sand.u32 %s182, 1
          %s875 = smul.addr %s874, 16
          %s876 = scalar_lea.vmem [#allocation15], %s875
          %877 = dma.done %s873, 256
        $region80: #{tpu_custom_call.1} parent=75 // pred_fallthru
          _
      $region76: #{tpu_custom_call.1} parent=5 // pred_fallthru
        _
    $region6: #{tpu_custom_call.1} parent=1 // loop_footer
      %s25 = sadd.s32 1, %s21
    $region7: #{tpu_custom_call.1} parent=1 // loop_footer_branch
      %20 = sbr.rel target = $region3
    $region8: #{tpu_custom_call.1} parent=1 // loop_exit
      _
    %878 = vsyncpa [#allocation7], 1
    %s879 = scalar_lea.sflag [#allocation7], 1
    %880 = vsyncpa %s879, 1
    %881 = vsyncpa [#allocation10], 1
    %s882 = scalar_lea.sflag [#allocation10], 1
    %883 = vsyncpa %s882, 1
    %884 = vsyncpa [#allocation13], 1
    %885 = vsyncpa [#allocation8], 1
    %s886 = scalar_lea.sflag [#allocation8], 1
    %887 = vsyncpa %s886, 1

</llo_original>
